<compile_context>
chip_gen: v7x
topology: tpu7x:2x2x1
jax: 0.10.0
libtpu: 0.0.40
codegen_flags: <defaults>
</compile_context>

<pallas_src>
import jax
import jax.numpy as jnp
import numpy as np
from jax.experimental import pallas as pl
from jax.experimental.pallas import tpu as pltpu


def _n_out_from(n_segment):
    # F.max_pool3d temporal extent: floor((T + 2*1 - 3)/2) + 1
    return (n_segment - 1) // 2 + 1


def _temporal_pool_kernel(x_ref, o_ref):
    """x_ref: (n_segment, C_TILE); o_ref: (n_out, C_TILE) VMEM tiles.

    Temporal max pool over the sublane axis: window 3, stride 2, padding 1.
    Out-of-range taps are dropped (equivalent to -inf padding for max).
    Single full-tile load -> register-level max -> single full-tile store.
    """
    n_seg = x_ref.shape[0]
    n_out = o_ref.shape[0]
    x = x_ref[...]  # one full-tile load; rows below slice the register value, not VMEM
    rows = []
    for t in range(n_out):
        taps = [i for i in (2 * t - 1, 2 * t, 2 * t + 1) if 0 <= i < n_seg]
        m = x[taps[0]:taps[0] + 1, :]
        for i in taps[1:]:
            m = jnp.maximum(m, x[i:i + 1, :])
        rows.append(m)
    o_ref[...] = jnp.concatenate(rows, axis=0)  # one unmasked full-tile store


def _choose_c_tile(C, n_batch, target_lanes=32768, min_lanes=512, min_steps=8):
    """Pick a lane-tile: multiple of 128 dividing C, big enough to stay near the
    HBM roofline, small enough to give plenty of grid steps and bounded VMEM."""
    if C % 128 != 0:
        return C  # fall back to full-extent block (allowed when block == array dim)
    k = C // 128
    divisors = sorted({d for i in range(1, int(k ** 0.5) + 1) if k % i == 0
                       for d in (i, k // i)})
    tiles = [128 * d for d in divisors]                 # ascending, last == C
    cands = [t for t in tiles if t <= target_lanes] or [tiles[0]]
    # largest lane-wide candidate that still yields enough grid steps to pipeline
    for t in reversed(cands):
        if t >= min_lanes and n_batch * (C // t) >= min_steps:
            return t
    wide = [t for t in cands if t >= min_lanes]
    return wide[0] if wide else cands[-1]


def temporal_pool(x, n_segment):
    """Equivalent of TemporalPool.temporal_pool (max_pool3d over time, k=3, s=2, p=1)."""
    nt, c, h, w = x.shape
    assert nt % n_segment == 0, "nt must be divisible by n_segment"
    n_batch = nt // n_segment
    C = c * h * w
    n_out = _n_out_from(n_segment)

    c_tile = _choose_c_tile(C, n_batch)
    assert C % c_tile == 0
    n_c_tiles = C // c_tile

    xr = x.reshape(n_batch, n_segment, C)

    itemsize = jnp.dtype(x.dtype).itemsize
    cost = pl.CostEstimate(
        flops=2 * n_batch * n_out * C,
        transcendentals=0,
        bytes_accessed=(n_batch * n_segment * C + n_batch * n_out * C) * itemsize,
    )

    out = pl.pallas_call(
        _temporal_pool_kernel,
        out_shape=jax.ShapeDtypeStruct((n_batch, n_out, C), x.dtype),
        grid=(n_batch, n_c_tiles),
        in_specs=[pl.BlockSpec((pl.Squeezed(), n_segment, c_tile),
                               lambda b, j: (b, 0, j))],
        out_specs=pl.BlockSpec((pl.Squeezed(), n_out, c_tile),
                               lambda b, j: (b, 0, j)),
        compiler_params=pltpu.CompilerParams(
            dimension_semantics=("parallel", "parallel")),
        cost_estimate=cost,
    )(xr)

    return out.reshape(n_batch * n_out, c, h, w)


def temporal_pool_module(x, n_segment):
    """TemporalPool.forward: temporal_pool followed by self.net.

    # TODO(synk): `net` is an arbitrary user-supplied nn.Module passed into __init__
    # (TemporalPool declares no parameters of its own); modeled as identity here.
    """
    pooled = temporal_pool(x, n_segment)
    return pooled  # net == identity


def _reference_temporal_pool(x, n_segment):
    """Pure-JAX reference matching F.max_pool3d((3,1,1),(2,1,1),(1,0,0))."""
    nt, c, h, w = x.shape
    n_batch = nt // n_segment
    n_out = _n_out_from(n_segment)
    xr = x.reshape(n_batch, n_segment, c, h, w)
    neg_inf = jnp.full((n_batch, 1, c, h, w), -jnp.inf, dtype=x.dtype)
    xp = jnp.concatenate([neg_inf, xr, neg_inf], axis=1)
    outs = []
    for t in range(n_out):
        win = xp[:, 2 * t:2 * t + 3]
        outs.append(jnp.max(win, axis=1))
    out = jnp.stack(outs, axis=1)
    return out.reshape(n_batch * n_out, c, h, w)


if __name__ == "__main__":
    key = jax.random.PRNGKey(0)
    n_segment = 8
    n_batch = 2
    nt, c, h, w = n_batch * n_segment, 4, 16, 16  # x: (16, 4, 16, 16)

    x = jax.random.normal(key, (nt, c, h, w), dtype=jnp.float32)

    y = temporal_pool_module(x, n_segment)
    y = jax.block_until_ready(y)

    y_ref = _reference_temporal_pool(x, n_segment)
    assert y.shape == (nt // 2, c, h, w), y.shape
    np.testing.assert_allclose(np.asarray(y), np.asarray(y_ref), rtol=0, atol=0)

    print("KERNEL_OK")
</pallas_src>

<mosaic_0001>
module attributes {stable_mosaic.version = 11 : i64} {
  func.func @_temporal_pool_kernel(%arg0: i32, %arg1: i32, %arg2: memref<1x8x512xf32, #tpu.memory_space<vmem>>, %arg3: memref<1x4x512xf32, #tpu.memory_space<vmem>>) attributes {dimension_semantics = [#tpu.dimension_semantics<parallel>, #tpu.dimension_semantics<parallel>], iteration_bounds = array<i64: 2, 2>, scalar_prefetch = 0 : i64, scratch_operands = 0 : i64, tpu.core_type = #tpu.core_type<tc>, window_params = [{transform_indices = @transform_0, window_bounds = array<i64: 1, 8, 512>}, {transform_indices = @transform_1, window_bounds = array<i64: 1, 4, 512>}]} {
    %c0 = arith.constant 0 : index
    %c0_0 = arith.constant 0 : index
    %c0_1 = arith.constant 0 : index
    %0 = vector.load %arg2[%c0, %c0_0, %c0_1] : memref<1x8x512xf32, #tpu.memory_space<vmem>>, vector<1x8x512xf32>
    %1 = vector.shape_cast %0 : vector<1x8x512xf32> to vector<8x512xf32>
    %2 = vector.extract_strided_slice %1 {offsets = [0, 0], sizes = [1, 512], strides = [1, 1]} : vector<8x512xf32> to vector<1x512xf32>
    %3 = vector.extract_strided_slice %1 {offsets = [1, 0], sizes = [1, 512], strides = [1, 1]} : vector<8x512xf32> to vector<1x512xf32>
    %4 = arith.maximumf %2, %3 : vector<1x512xf32>
    %5 = vector.extract_strided_slice %1 {offsets = [1, 0], sizes = [1, 512], strides = [1, 1]} : vector<8x512xf32> to vector<1x512xf32>
    %6 = vector.extract_strided_slice %1 {offsets = [2, 0], sizes = [1, 512], strides = [1, 1]} : vector<8x512xf32> to vector<1x512xf32>
    %7 = arith.maximumf %5, %6 : vector<1x512xf32>
    %8 = vector.extract_strided_slice %1 {offsets = [3, 0], sizes = [1, 512], strides = [1, 1]} : vector<8x512xf32> to vector<1x512xf32>
    %9 = arith.maximumf %7, %8 : vector<1x512xf32>
    %10 = vector.extract_strided_slice %1 {offsets = [3, 0], sizes = [1, 512], strides = [1, 1]} : vector<8x512xf32> to vector<1x512xf32>
    %11 = vector.extract_strided_slice %1 {offsets = [4, 0], sizes = [1, 512], strides = [1, 1]} : vector<8x512xf32> to vector<1x512xf32>
    %12 = arith.maximumf %10, %11 : vector<1x512xf32>
    %13 = vector.extract_strided_slice %1 {offsets = [5, 0], sizes = [1, 512], strides = [1, 1]} : vector<8x512xf32> to vector<1x512xf32>
    %14 = arith.maximumf %12, %13 : vector<1x512xf32>
    %15 = vector.extract_strided_slice %1 {offsets = [5, 0], sizes = [1, 512], strides = [1, 1]} : vector<8x512xf32> to vector<1x512xf32>
    %16 = vector.extract_strided_slice %1 {offsets = [6, 0], sizes = [1, 512], strides = [1, 1]} : vector<8x512xf32> to vector<1x512xf32>
    %17 = arith.maximumf %15, %16 : vector<1x512xf32>
    %18 = vector.extract_strided_slice %1 {offsets = [7, 0], sizes = [1, 512], strides = [1, 1]} : vector<8x512xf32> to vector<1x512xf32>
    %19 = arith.maximumf %17, %18 : vector<1x512xf32>
    %20 = tpu.concatenate %4, %9, %14, %19 in 0 : vector<1x512xf32>, vector<1x512xf32>, vector<1x512xf32>, vector<1x512xf32> -> vector<4x512xf32>
    %c0_2 = arith.constant 0 : index
    %c0_3 = arith.constant 0 : index
    %c0_4 = arith.constant 0 : index
    %21 = vector.load %arg3[%c0_2, %c0_3, %c0_4] : memref<1x4x512xf32, #tpu.memory_space<vmem>>, vector<1x4x512xf32>
    %22 = vector.shape_cast %21 : vector<1x4x512xf32> to vector<4x512xf32>
    %23 = vector.shape_cast %20 : vector<4x512xf32> to vector<1x4x512xf32>
    tpu.vector_store %arg3[%c0_2, %c0_3, %c0_4], %23 {strides = array<i32>} : memref<1x4x512xf32, #tpu.memory_space<vmem>>, vector<1x4x512xf32>,
    return
  }
  func.func @transform_0(%arg0: i32, %arg1: i32) -> (i32, i32, i32) {
    %c0_i32 = arith.constant 0 : i32
    %c0_i32_0 = arith.constant 0 : i32
    return %arg0, %c0_i32, %arg1 : i32, i32, i32
  }
  func.func @transform_1(%arg0: i32, %arg1: i32) -> (i32, i32, i32) {
    %c0_i32 = arith.constant 0 : i32
    %c0_i32_0 = arith.constant 0 : i32
    return %arg0, %c0_i32, %arg1 : i32, i32, i32
  }
}

</mosaic_0001>

<llo_original>
// kernel: tpu_custom_call.1
$region0: #{tpu_custom_call.1}
  #allocation0 [shape = 'u32[]', space=smem, size = 0x4, offset = 0x4, fixed_abs, tag = 'smem constant byte address 0x4 - core index']
  #allocation1 [shape = 'u32[144,128]{1,0:T(1,128)}', space=vmem, size = 0x12000, scoped, tag = 'internal scratch']
  %s0 = inlined_call_operand.hbm [shape: f32[2,8,1024], index: 0, kind: input, shape index: {}]
  %s1 = inlined_call_operand.hbm [shape: f32[2,4,1024], index: 1, kind: output, shape index: {}]
  %s2 = sld [smem:[#allocation0]]
  $region41: #{tpu_custom_call.1} parent=0
    _
  %s4 = ssub.s32 1, %s2
  %s5 = scalar_select 0, %s4, %s2
  $region1: #{tpu_custom_call.1} parent=0
    #allocation2 [shape = 'u8[32768]{0}', space=vmem, size = 0x8000, scoped, tag = 'input window, operand 0']
    #allocation3 [shape = 's32[2]{0}', space=sflag, size = 0x8, scoped, tag = 'scoped memory for tpu_custom_call.1']
    #allocation4 [shape = 's32[2]{0}', space=sflag, size = 0x8, scoped, tag = 'scoped memory for tpu_custom_call.1']
    #allocation5 [shape = 'u8[16384]{0}', space=vmem, size = 0x4000, scoped, tag = 'output window, operand 0']
    %6 = vsyncpa [#allocation3], 0
    %s7 = scalar_lea.sflag [#allocation3], 1
    %8 = vsyncpa %s7, 0
    %9 = vsyncpa [#allocation4], 0
    %s10 = scalar_lea.sflag [#allocation4], 1
    %11 = vsyncpa %s10, 0
    loop: start=0, step=1, limit=6
    $region2: #{tpu_custom_call.1} parent=1 // loop_pre_header
      _
    $region3: #{tpu_custom_call.1} parent=1 // loop_header
      %s13 = sphi 0, %s17
      %p14 = scmp.ge.s32.totalorder %s13, 6
      %s20 = sphi 0, %s32
      %s21 = sphi 0, %s28
      %s22 = sphi 0, %s20
      %s23 = sphi 0, %s21
      %s24 = sphi 0, %s22
      %s25 = sphi 0, %s23
      %s37 = sphi 0, %s39
      %s40 = sphi 0, %s37
      %s41 = sphi 0, %s40
      %s57 = sphi 0, %s41
      %s65 = sphi 0, %s67
      %s68 = sphi 0, %s65
      %s69 = sphi 0, %s68
      %s85 = sphi 0, %s69
    $region4: #{tpu_custom_call.1} parent=1 // loop_header_branch
      %16 = sbr.rel (%p14) target = $region8
    $region5: #{tpu_custom_call.1} parent=1 // loop_body
      %s18 = ssub.s32 %s13, 1
      %s19 = ssub.s32 %s13, 2
      %s26 = sadd.s32 1, %s21
      %p27 = scmp.ge.s32.totalorder %s26, 2
      %s28 = scalar_select %p27, 0, %s26
      %s29 = sadd.s32 1, %s20
      %s30 = scalar_select %p27, %s29, %s20
      %p31 = scmp.ge.s32.totalorder %s30, 2
      %s32 = scalar_select %p31, 0, %s30
      %s33 = ssub.s32 %s20, %s32
      %s34 = ssub.s32 %s21, %s28
      %s35 = sor.u32 %s33, %s34
      %p36 = scmp.eq.s32.totalorder %s35, 0
      %s38 = sadd.s32 %s37, 1
      %s39 = scalar_select %p36, %s37, %s38
      %p42 = pneg %p36
      %p43 = scmp.eq.s32.totalorder %s13, 3
      %p44 = por %p42, %p43
      %p45 = scmp.ne.s32.totalorder %s37, %s40
      %p46 = scmp.eq.s32.totalorder %s13, 0
      %p47 = por %p45, %p46
      %p48 = scmp.ne.s32.totalorder %s37, %s40
      %p49 = scmp.eq.s32.totalorder %s18, 3
      %p50 = por %p48, %p49
      %p51 = scmp.ne.s32.totalorder %s40, %s41
      %p52 = scmp.eq.s32.totalorder %s18, 0
      %p53 = por %p51, %p52
      %p54 = scmp.ne.s32.totalorder %s40, %s41
      %p55 = scmp.eq.s32.totalorder %s19, 3
      %p56 = por %p54, %p55
      %p58 = scmp.ne.s32.totalorder %s41, %s57
      %p59 = scmp.eq.s32.totalorder %s19, 0
      %p60 = por %p58, %p59
      %s61 = ssub.s32 %s20, %s32
      %s62 = ssub.s32 %s21, %s28
      %s63 = sor.u32 %s61, %s62
      %p64 = scmp.eq.s32.totalorder %s63, 0
      %s66 = sadd.s32 %s65, 1
      %s67 = scalar_select %p64, %s65, %s66
      %p70 = pneg %p64
      %p71 = scmp.eq.s32.totalorder %s13, 3
      %p72 = por %p70, %p71
      %p73 = scmp.ne.s32.totalorder %s65, %s68
      %p74 = scmp.eq.s32.totalorder %s13, 0
      %p75 = por %p73, %p74
      %p76 = scmp.ne.s32.totalorder %s65, %s68
      %p77 = scmp.eq.s32.totalorder %s18, 3
      %p78 = por %p76, %p77
      %p79 = scmp.ne.s32.totalorder %s68, %s69
      %p80 = scmp.eq.s32.totalorder %s18, 0
      %p81 = por %p79, %p80
      %p82 = scmp.ne.s32.totalorder %s68, %s69
      %p83 = scmp.eq.s32.totalorder %s19, 3
      %p84 = por %p82, %p83
      %p86 = scmp.ne.s32.totalorder %s69, %s85
      %p87 = scmp.eq.s32.totalorder %s19, 0
      %p88 = por %p86, %p87
      %p89 = scmp.le.s32.totalorder 1, %s13
      %p90 = scmp.lt.s32.totalorder %s13, 5
      %p91 = pnand %p89, %p90
      %p92 = pneg %p91
      // Predicated region
      $region9: #{tpu_custom_call.1} parent=5 // pred_check
        _
      $region10: #{tpu_custom_call.1} parent=5 // pred_check_branch
        %94 = sbr.rel (%p91) target = $region12
      $region11: #{tpu_custom_call.1} parent=5 // pred_region
        %s95 = ssub.s32 %s13, 1
      $region12: #{tpu_custom_call.1} parent=5 // pred_fallthru
        _
      %p96 = scmp.lt.s32.totalorder %s13, 4
      // Predicated region
      $region13: #{tpu_custom_call.1} parent=5 // pred_check
        %p97 = pneg %p96
      $region14: #{tpu_custom_call.1} parent=5 // pred_check_branch
        %99 = sbr.rel (%p97) target = $region16
      $region15: #{tpu_custom_call.1} parent=5 // pred_region
        // Predicated region
        $region17: #{tpu_custom_call.1} parent=15 // pred_check
          %p100 = pneg %p47
        $region18: #{tpu_custom_call.1} parent=15 // pred_check_branch
          %102 = sbr.rel (%p100) target = $region20
        $region19: #{tpu_custom_call.1} parent=15 // pred_region
          %s103 = sand.u32 %s37, 1
          %s104 = scalar_lea.sflag [#allocation3], %s103
          %s105 = sand.u32 %s37, 1
          %s106 = smul.addr %s105, 32
          %s107 = scalar_lea.vmem [#allocation2], %s106
          %s108 = smul.u32 4, %s21
          %s110 = ssub.s32 512, 512
          %111 = vsyncadd %s104, %s110
          %s112 = smul.addr %s20, 8
          %s113 = sadd.s32 %s108, %s112
          %s114 = smul.addr %s113, 128
          %s115 = scalar_lea.hbm %s0, %s114
          %s117 = sshll.u32 %s107, 4
          %s118 = int_to_ptr.vmem [resolvable:$true] %s117
          %120 = dma.hbm_to_vmem [thread:$0]  %s115, 512, %s118, %s104
        $region20: #{tpu_custom_call.1} parent=15 // pred_fallthru
          _
      $region16: #{tpu_custom_call.1} parent=5 // pred_fallthru
        _
      %p121 = scmp.le.s32.totalorder 1, %s13
      %p122 = scmp.lt.s32.totalorder %s13, 5
      %p123 = pnand %p121, %p122
      %p124 = pneg %p123
      // Predicated region
      $region21: #{tpu_custom_call.1} parent=5 // pred_check
        _
      $region22: #{tpu_custom_call.1} parent=5 // pred_check_branch
        %126 = sbr.rel (%p123) target = $region24
      $region23: #{tpu_custom_call.1} parent=5 // pred_region
        %s127 = ssub.s32 %s13, 1
        %s128 = sand.u32 %s40, 1
        %s129 = scalar_lea.sflag [#allocation3], %s128
        %s130 = sand.u32 %s40, 1
        %s131 = smul.addr %s130, 32
        %s132 = scalar_lea.vmem [#allocation2], %s131
        // Predicated region
        $region25: #{tpu_custom_call.1} parent=23 // pred_check
          %p133 = pneg %p53
        $region26: #{tpu_custom_call.1} parent=23 // pred_check_branch
          %135 = sbr.rel (%p133) target = $region28
        $region27: #{tpu_custom_call.1} parent=23 // pred_region
          %136 = dma.done %s129, 512
        $region28: #{tpu_custom_call.1} parent=23 // pred_fallthru
          _
        %s137 = sand.u32 %s40, 1
        %s138 = scalar_lea.sflag [#allocation3], %s137
        %s139 = sand.u32 %s40, 1
        %s140 = smul.addr %s139, 32
        %s141 = scalar_lea.vmem [#allocation2], %s140
        %p142 = pneg %p53
        %p143 = pneg %p50
        %p144 = pneg %p81
        %p145 = pneg %p78
        %s146 = sand.u32 %s68, 1
        %s147 = scalar_lea.sflag [#allocation4], %s146
        %s148 = sand.u32 %s68, 1
        %s149 = smul.addr %s148, 16
        %s150 = scalar_lea.vmem [#allocation5], %s149
        %s151 = smul.u32 4, %s23
        %s152 = smul.u32 4, %s23
        %v153 = vld [vmem:[%s132] sm:$0xff]
        %v154 = vld [vmem:[%s132 + $0x8] sm:$0xff]
        %v155 = vld [vmem:[%s132 + $0x10] sm:$0xff]
        %v156 = vld [vmem:[%s132 + $0x18] sm:$0xff]
        %v161 = vrot.slane %v153, 1
        %v162 = vrot.slane %v154, 1
        %v163 = vrot.slane %v155, 1
        %v164 = vrot.slane %v156, 1
        %v169 = vmax.f32 %v153, %v161
        %v170 = vmax.f32 %v154, %v162
        %v171 = vmax.f32 %v155, %v163
        %v172 = vmax.f32 %v156, %v164
        %v173 = vrot.slane %v153, 2
        %v174 = vrot.slane %v154, 2
        %v175 = vrot.slane %v155, 2
        %v176 = vrot.slane %v156, 2
        %v181 = vmax.f32 %v169, %v173
        %v182 = vmax.f32 %v170, %v174
        %v183 = vmax.f32 %v171, %v175
        %v184 = vmax.f32 %v172, %v176
        %v189 = vrot.slane %v181, 1
        %v190 = vrot.slane %v182, 1
        %v191 = vrot.slane %v183, 1
        %v192 = vrot.slane %v184, 1
        %v197 = vrot.slane %v181, 2
        %v198 = vrot.slane %v182, 2
        %v199 = vrot.slane %v183, 2
        %v200 = vrot.slane %v184, 2
        %vm205 = vcmask 1040384
        %v206 = vsel %vm205, %v169, %v181
        %v207 = vsel %vm205, %v170, %v182
        %v208 = vsel %vm205, %v171, %v183
        %v209 = vsel %vm205, %v172, %v184
        %vm210 = vcmask 1041408
        %v211 = vsel %vm210, %v206, %v189
        %v212 = vsel %vm210, %v207, %v190
        %v213 = vsel %vm210, %v208, %v191
        %v214 = vsel %vm210, %v209, %v192
        %vm215 = vcmask 1042432
        %v216 = vsel %vm215, %v211, %v197
        %v217 = vsel %vm215, %v212, %v198
        %v218 = vsel %vm215, %v213, %v199
        %v219 = vsel %vm215, %v214, %v200
        %v224 = vcombine.low %v216, %v217
        %v225 = vcombine.low %v218, %v219
        %228 = vst [vmem:[%s150] sm:$0xff] %v224
        %229 = vst [vmem:[%s150 + $0x8] sm:$0xff] %v225
        %s230 = sand.u32 %s68, 1
        %s231 = scalar_lea.sflag [#allocation4], %s230
        %s232 = sand.u32 %s68, 1
        %s233 = smul.addr %s232, 16
        %s234 = scalar_lea.vmem [#allocation5], %s233
        // Predicated region
        $region29: #{tpu_custom_call.1} parent=23 // pred_check
          %p235 = pneg %p78
        $region30: #{tpu_custom_call.1} parent=23 // pred_check_branch
          %237 = sbr.rel (%p235) target = $region32
        $region31: #{tpu_custom_call.1} parent=23 // pred_region
          %s238 = smul.u32 4, %s23
          %s240 = ssub.s32 256, 256
          %241 = vsyncadd %s231, %s240
          %s242 = smul.addr %s22, 8
          %s243 = sadd.s32 %s238, %s242
          %s244 = smul.addr %s243, 64
          %s245 = scalar_lea.hbm %s1, %s244
          %s247 = sshll.u32 %s234, 4
          %s248 = int_to_ptr.vmem [resolvable:$true] %s247
          %250 = dma.vmem_to_hbm [thread:$0]  %s248, 256, %s245, %s231
        $region32: #{tpu_custom_call.1} parent=23 // pred_fallthru
          _
      $region24: #{tpu_custom_call.1} parent=5 // pred_fallthru
        _
      %p251 = scmp.le.s32.totalorder 2, %s13
      // Predicated region
      $region33: #{tpu_custom_call.1} parent=5 // pred_check
        %p252 = pneg %p251
      $region34: #{tpu_custom_call.1} parent=5 // pred_check_branch
        %254 = sbr.rel (%p252) target = $region36
      $region35: #{tpu_custom_call.1} parent=5 // pred_region
        %s255 = ssub.s32 %s13, 2
        // Predicated region
        $region37: #{tpu_custom_call.1} parent=35 // pred_check
          %p256 = pneg %p84
        $region38: #{tpu_custom_call.1} parent=35 // pred_check_branch
          %258 = sbr.rel (%p256) target = $region40
        $region39: #{tpu_custom_call.1} parent=35 // pred_region
          %s259 = sand.u32 %s69, 1
          %s260 = scalar_lea.sflag [#allocation4], %s259
          %s261 = sand.u32 %s69, 1
          %s262 = smul.addr %s261, 16
          %s263 = scalar_lea.vmem [#allocation5], %s262
          %264 = dma.done %s260, 256
        $region40: #{tpu_custom_call.1} parent=35 // pred_fallthru
          _
      $region36: #{tpu_custom_call.1} parent=5 // pred_fallthru
        _
    $region6: #{tpu_custom_call.1} parent=1 // loop_footer
      %s17 = sadd.s32 1, %s13
    $region7: #{tpu_custom_call.1} parent=1 // loop_footer_branch
      %12 = sbr.rel target = $region3
    $region8: #{tpu_custom_call.1} parent=1 // loop_exit
      _
    %265 = vsyncpa [#allocation3], 1
    %s266 = scalar_lea.sflag [#allocation3], 1
    %267 = vsyncpa %s266, 1
    %268 = vsyncpa [#allocation4], 1
    %s269 = scalar_lea.sflag [#allocation4], 1
    %270 = vsyncpa %s269, 1

</llo_original>
